<compile_context>
chip_gen: v7x
topology: tpu7x:2x2x1
jax: 0.10.0
libtpu: 0.0.40
codegen_flags: <defaults>
</compile_context>

<pallas_src>
import jax
import jax.numpy as jnp
from jax.experimental import pallas as pl
from jax.experimental.pallas import tpu as pltpu


def _mul_kernel(w_ref, x_ref, o_ref):
    # w_ref: (1,) scalar in SMEM; x_ref / o_ref: streamed VMEM tiles.
    o_ref[...] = (x_ref[...] * w_ref[0]).astype(o_ref.dtype)


# itemsize -> sublane packing (f32: 8, bf16/f16: 16, int8/fp8: 32).
_SUBLANE_MULT = {4: 8, 2: 16, 1: 32}
_LANE_CANDIDATES = (1024, 512, 256, 128)
_MIN_GRID_STEPS = 4  # keep both v7x TensorCores fed when data spans >2 blocks


def _round_up(n: int, m: int) -> int:
    return ((n + m - 1) // m) * m


def _tpu_vmem_capacity_bytes() -> int:
    """Physical VMEM per core; conservative (v7x-sized) default if query fails."""
    cap = 64 << 20
    try:
        info = pltpu.get_tpu_info()
        cap = int(getattr(info, "vmem_capacity_bytes", cap)) or cap
    except Exception:
        pass
    return cap


def mul(x: jax.Array, weight, *, donate: bool = False) -> jax.Array:
    """Elementwise x * weight (scalar weight), matching torch `x * self.weight`."""
    orig_shape = x.shape
    in_dtype = x.dtype
    total = x.size

    # dtype promotion like torch: float scalar * int tensor -> float tensor,
    # float tensors keep their own dtype.
    w_for_type = weight.dtype if isinstance(weight, jax.Array) else weight
    out_dtype = jnp.result_type(in_dtype, w_for_type)

    if total == 0:
        return jnp.zeros(orig_shape, dtype=out_dtype)

    if jnp.issubdtype(out_dtype, jnp.floating):
        w_dtype = jnp.float32      # full-precision scalar broadcast on the VPU
    elif jnp.issubdtype(out_dtype, jnp.integer):
        w_dtype = jnp.int32        # exact integer multiply; SMEM scalars are 32-bit
    else:
        w_dtype = out_dtype
    w = jnp.asarray(weight, dtype=w_dtype).reshape(1)

    in_itemsize = jnp.dtype(in_dtype).itemsize
    out_itemsize = jnp.dtype(out_dtype).itemsize
    sublane = _SUBLANE_MULT.get(in_itemsize, 8)

    # Generation-aware block target: ~4 MiB on v7x (64 MiB VMEM), ~8 MiB on
    # v5e/v6e (128 MiB VMEM).  Amortizes the ~0.35 us per-step overhead while
    # keeping the double-buffered footprint modest.
    vmem_cap = _tpu_vmem_capacity_bytes()
    block_target = (4 << 20) if vmem_cap <= (64 << 20) else (8 << 20)

    # Widest lane dim that divides the flat size -> lane-dense, unmasked stores.
    lanes = next((c for c in _LANE_CANDIDATES if total % c == 0), None)

    if lanes is not None:
        # Hot path: flatten (no copy) into a lane-dense 2-D slab and stream it.
        rows = total // lanes
        x_view = x.reshape(rows, lanes)
        row_bytes = lanes * in_itemsize
        if rows * row_bytes <= block_target or rows <= sublane:
            tr = rows                                  # single full-array block
        else:
            tr = max(sublane, (block_target // row_bytes) // sublane * sublane)
            if rows * row_bytes > 2 * block_target:
                # Keep >= _MIN_GRID_STEPS steps: feeds both v7x TCs and keeps
                # the DMA pipeline > 1 deep (harmless on v5e/v6e).
                tr = min(tr, max(sublane,
                                 _round_up(pl.cdiv(rows, _MIN_GRID_STEPS), sublane)))
            tr = min(tr, rows)
        grid = (pl.cdiv(rows, tr),)
        block_shape = (tr, lanes)
        index_map = lambda i: (i, 0)
        block_elems = tr * lanes
        out_struct = jax.ShapeDtypeStruct((rows, lanes), out_dtype)
    else:
        # Ragged fallback (size not a multiple of 128): stream the flat array
        # 1-D and let Pallas mask the partial final block — no jnp.pad or
        # output-slice extra HBM passes.
        x_view = x.reshape(total)
        chunk = sublane * 128
        if total * in_itemsize <= block_target or total <= chunk:
            blk = total                                # single full-array block
        else:
            blk = max(chunk, (block_target // in_itemsize) // chunk * chunk)
            if total * in_itemsize > 2 * block_target:
                blk = min(blk, max(chunk,
                                   _round_up(pl.cdiv(total, _MIN_GRID_STEPS), chunk)))
            blk = min(blk, total)
        grid = (pl.cdiv(total, blk),)
        block_shape = (blk,)
        index_map = lambda i: (i,)
        block_elems = blk
        out_struct = jax.ShapeDtypeStruct((total,), out_dtype)

    # Cover the double-buffered in+out footprint explicitly (v5e scoped default
    # is only 16 MiB), with headroom for Mosaic internal scratch, capped well
    # below the physical VMEM capacity.
    footprint = 2 * block_elems * (in_itemsize + out_itemsize)
    vmem_limit = min(max(footprint + (16 << 20), 32 << 20),
                     max(32 << 20, (vmem_cap * 3) // 4))

    aliases = {1: 0} if (donate and in_dtype == out_dtype) else {}

    out = pl.pallas_call(
        _mul_kernel,
        out_shape=out_struct,
        grid=grid,
        in_specs=[
            pl.BlockSpec(memory_space=pltpu.MemorySpace.SMEM),  # scalar weight
            pl.BlockSpec(block_shape, index_map),               # streamed input
        ],
        out_specs=pl.BlockSpec(block_shape, index_map),
        compiler_params=pltpu.CompilerParams(
            dimension_semantics=("parallel",),
            vmem_limit_bytes=int(vmem_limit),
        ),
        cost_estimate=pl.CostEstimate(
            flops=total,
            transcendentals=0,
            bytes_accessed=total * (in_itemsize + out_itemsize),
        ),
        input_output_aliases=aliases,
    )(w, x_view)

    return out.reshape(orig_shape)


if __name__ == "__main__":
    key = jax.random.PRNGKey(0)
    # NCHW input, small shapes: batch=2, channels=4, spatial=16x16.
    x = jax.random.normal(key, (2, 4, 16, 16), dtype=jnp.float32)
    weight = 1.5  # deterministic scalar weight (module stores whatever is passed in)

    out = mul(x, weight)
    jax.block_until_ready(out)

    expected = x * weight
    assert out.shape == x.shape and out.dtype == x.dtype
    assert jnp.allclose(out, expected, atol=1e-6, rtol=1e-6)
    print("KERNEL_OK")
</pallas_src>

<mosaic_0001>
module attributes {stable_mosaic.version = 11 : i64} {
  func.func @_mul_kernel(%arg0: i32, %arg1: memref<1xf32, #tpu.memory_space<smem>>, %arg2: memref<2x1024xf32, #tpu.memory_space<vmem>>, %arg3: memref<2x1024xf32, #tpu.memory_space<vmem>>) attributes {dimension_semantics = [#tpu.dimension_semantics<parallel>], iteration_bounds = array<i64: 1>, scalar_prefetch = 0 : i64, scratch_operands = 0 : i64, tpu.core_type = #tpu.core_type<tc>, window_params = [{transform_indices = @transform_0, window_bounds = array<i64: 1>}, {transform_indices = @transform_1, window_bounds = array<i64: 2, 1024>}, {transform_indices = @transform_2, window_bounds = array<i64: 2, 1024>}]} {
    %c0 = arith.constant 0 : index
    %c0_0 = arith.constant 0 : index
    %0 = vector.load %arg2[%c0, %c0_0] : memref<2x1024xf32, #tpu.memory_space<vmem>>, vector<2x1024xf32>
    %c0_1 = arith.constant 0 : index
    %1 = memref.load %arg1[%c0_1] : memref<1xf32, #tpu.memory_space<smem>>
    %2 = vector.broadcast %1 : f32 to vector<2x1024xf32>
    %3 = arith.mulf %0, %2 : vector<2x1024xf32>
    %c0_2 = arith.constant 0 : index
    %c0_3 = arith.constant 0 : index
    %4 = vector.load %arg3[%c0_2, %c0_3] : memref<2x1024xf32, #tpu.memory_space<vmem>>, vector<2x1024xf32>
    tpu.vector_store %arg3[%c0_2, %c0_3], %3 {strides = array<i32>} : memref<2x1024xf32, #tpu.memory_space<vmem>>, vector<2x1024xf32>,
    return
  }
  func.func @transform_0(%arg0: i32) -> i32 {
    %c0_i32 = arith.constant 0 : i32
    %c0_i32_0 = arith.constant 0 : i32
    return %c0_i32 : i32
  }
  func.func @transform_1(%arg0: i32) -> (i32, i32) {
    %c0_i32 = arith.constant 0 : i32
    %c0_i32_0 = arith.constant 0 : i32
    return %arg0, %c0_i32 : i32, i32
  }
  func.func @transform_2(%arg0: i32) -> (i32, i32) {
    %c0_i32 = arith.constant 0 : i32
    %c0_i32_0 = arith.constant 0 : i32
    return %arg0, %c0_i32 : i32, i32
  }
}

</mosaic_0001>

<llo_original>
// kernel: tpu_custom_call.1
$region0: #{tpu_custom_call.1}
  #allocation0 [shape = 'u32[]', space=smem, size = 0x4, offset = 0x4, fixed_abs, tag = 'smem constant byte address 0x4 - core index']
  #allocation1 [shape = 'u32[144,128]{1,0:T(1,128)}', space=vmem, size = 0x12000, scoped, tag = 'internal scratch']
  #allocation2 [shape = 'f32[1]{0:T(128)S(6)}', space=smem, size = 0x200, scoped, tag = 'scoped memory for tpu_custom_call.1']
  %s0 = inlined_call_operand.<no memory space> [shape: f32[1], index: 0, kind: input, shape index: {}]
  %s1 = inlined_call_operand.hbm [shape: f32[2,1024], index: 1, kind: input, shape index: {}]
  %s2 = inlined_call_operand.hbm [shape: f32[2,1024], index: 2, kind: output, shape index: {}]
  %s3 = sld [smem:[#allocation0]]
  $region22: #{tpu_custom_call.1} parent=0
    _
  %s5 = ssub.s32 1, %s3
  %s6 = scalar_select 0, %s5, %s3
  %7 = sst [smem:[#allocation2]] %s0
  $region1: #{tpu_custom_call.1} parent=0
    #allocation3 [shape = 'u8[8192]{0}', space=vmem, size = 0x2000, scoped, tag = 'input window, operand 1, single buffered']
    #allocation4 [shape = 's32[1]{0}', space=sflag, size = 0x4, scoped, tag = 'scoped memory for tpu_custom_call.1']
    #allocation5 [shape = 's32[1]{0}', space=sflag, size = 0x4, scoped, tag = 'scoped memory for tpu_custom_call.1']
    #allocation6 [shape = 'u8[8192]{0}', space=vmem, size = 0x2000, scoped, tag = 'output window, operand 0, single buffered']
    %8 = vsyncpa [#allocation4], 0
    %9 = vsyncpa [#allocation5], 0
    // Predicated region
    $region2: #{tpu_custom_call.1} parent=1 // pred_check
      _
    $region3: #{tpu_custom_call.1} parent=1 // pred_check_branch
      %11 = sbr.rel (0) target = $region5
    $region4: #{tpu_custom_call.1} parent=1 // pred_region
      _
    $region5: #{tpu_custom_call.1} parent=1 // pred_fallthru
      _
    // Predicated region
    $region6: #{tpu_custom_call.1} parent=1 // pred_check
      _
    $region7: #{tpu_custom_call.1} parent=1 // pred_check_branch
      %13 = sbr.rel (0) target = $region9
    $region8: #{tpu_custom_call.1} parent=1 // pred_region
      %s15 = ssub.s32 256, 256
      %16 = vsyncadd [#allocation4], %s15
      %s18 = sshll.u32 [#allocation3], 4
      %s19 = int_to_ptr.vmem [resolvable:$true] %s18
      %21 = dma.hbm_to_vmem [thread:$0]  %s1, 256, %s19, [#allocation4]
    $region9: #{tpu_custom_call.1} parent=1 // pred_fallthru
      _
    // Predicated region
    $region10: #{tpu_custom_call.1} parent=1 // pred_check
      _
    $region11: #{tpu_custom_call.1} parent=1 // pred_check_branch
      %23 = sbr.rel (0) target = $region13
    $region12: #{tpu_custom_call.1} parent=1 // pred_region
      %24 = dma.done [#allocation4], 256
    $region13: #{tpu_custom_call.1} parent=1 // pred_fallthru
      _
    %v25 = vld [vmem:[#allocation3] sm:$0xff]
    %v26 = vld [vmem:[#allocation3 + $0x8] sm:$0xff]
    %s27 = sld [smem:[#allocation2]]
    %v28 = vstv %s27
    %v29 = vmul.f32 %v25, %v28
    %v30 = vmul.f32 %v26, %v28
    %31 = vst [vmem:[#allocation6] sm:$0xff] %v29
    %32 = vst [vmem:[#allocation6 + $0x8] sm:$0xff] %v30
    // Predicated region
    $region14: #{tpu_custom_call.1} parent=1 // pred_check
      _
    $region15: #{tpu_custom_call.1} parent=1 // pred_check_branch
      %34 = sbr.rel (0) target = $region17
    $region16: #{tpu_custom_call.1} parent=1 // pred_region
      %s36 = ssub.s32 256, 256
      %37 = vsyncadd [#allocation5], %s36
      %s39 = sshll.u32 [#allocation6], 4
      %s40 = int_to_ptr.vmem [resolvable:$true] %s39
      %42 = dma.vmem_to_hbm [thread:$0]  %s40, 256, %s2, [#allocation5]
    $region17: #{tpu_custom_call.1} parent=1 // pred_fallthru
      _
    // Predicated region
    $region18: #{tpu_custom_call.1} parent=1 // pred_check
      _
    $region19: #{tpu_custom_call.1} parent=1 // pred_check_branch
      %44 = sbr.rel (0) target = $region21
    $region20: #{tpu_custom_call.1} parent=1 // pred_region
      %45 = dma.done [#allocation5], 256
    $region21: #{tpu_custom_call.1} parent=1 // pred_fallthru
      _
    %46 = vsyncpa [#allocation4], 1
    %47 = vsyncpa [#allocation5], 1

</llo_original>
